<compile_context>
chip_gen: v5e
topology: v5e:2x2
jax: 0.10.0
libtpu: 0.0.40
codegen_flags: <defaults>
</compile_context>

<pallas_src>
import jax
import jax.numpy as jnp
from jax.experimental import pallas as pl
from jax.experimental.pallas import tpu as pltpu


def _round_up(x, m):
    return ((x + m - 1) // m) * m


def _mlp_kernel(x_ref, w1_ref, b1_ref, w2_ref, b2_ref, w3_ref, b3_ref, o_ref):
    """Inference path: fused 3-layer MLP on one batch tile (weights VMEM-resident)."""
    x = x_ref[...].astype(jnp.bfloat16)
    z1 = jnp.tanh(jnp.dot(x, w1_ref[...], preferred_element_type=jnp.float32) + b1_ref[...])
    z2 = jnp.tanh(jnp.dot(z1.astype(jnp.bfloat16), w2_ref[...],
                          preferred_element_type=jnp.float32) + b2_ref[...])
    out = jnp.dot(z2.astype(jnp.bfloat16), w3_ref[...],
                  preferred_element_type=jnp.float32) + b3_ref[...]
    o_ref[...] = out.astype(o_ref.dtype)


def _mlp_dropout_kernel(x_ref, w1_ref, b1_ref, w2_ref, b2_ref, w3_ref, b3_ref,
                        m1_ref, m2_ref, o_ref):
    """Training path: same MLP with pre-scaled dropout masks (values in {0, 1/(1-p)})."""
    x = x_ref[...].astype(jnp.bfloat16)
    z1 = jnp.tanh(jnp.dot(x, w1_ref[...], preferred_element_type=jnp.float32) + b1_ref[...])
    z1 = z1 * m1_ref[...]
    z2 = jnp.tanh(jnp.dot(z1.astype(jnp.bfloat16), w2_ref[...],
                          preferred_element_type=jnp.float32) + b2_ref[...])
    z2 = z2 * m2_ref[...]
    out = jnp.dot(z2.astype(jnp.bfloat16), w3_ref[...],
                  preferred_element_type=jnp.float32) + b3_ref[...]
    o_ref[...] = out.astype(o_ref.dtype)


def net_forward(x, params, *, dropout_decision=False, dropout_rate=0.5, seed=0,
                block_rows=1024):
    """Fused Pallas MLP forward. Batch grid over rows; weights/biases stay VMEM-resident."""
    w1, b1, w2, b2, w3, b3 = params
    B, n_inp = x.shape
    n_hid1 = w1.shape[1]
    n_hid2 = w2.shape[1]
    n_out = w3.shape[1]

    # --- Lane-dense output: pad the last layer to a multiple of 128 output columns. ---
    n_out_p = _round_up(n_out, 128)
    if n_out_p != n_out:
        w3p = jnp.zeros((n_hid2, n_out_p), w3.dtype).at[:, :n_out].set(w3)
        b3p = jnp.zeros((1, n_out_p), b3.dtype).at[:, :n_out].set(b3)
    else:
        w3p, b3p = w3, b3

    # --- bf16 weights once, outside the kernel (biases stay f32). ---
    w1b = w1.astype(jnp.bfloat16)
    w2b = w2.astype(jnp.bfloat16)
    w3b = w3p.astype(jnp.bfloat16)

    # --- Batch tile selection. ---
    if B <= 256:
        tb = B                                            # single tile, nothing to shard
    else:
        br = max(128, (int(block_rows) // 128) * 128)     # tiles in multiples of 128 rows
        tb = min(br, _round_up(pl.cdiv(B, 2), 128))       # >=2 grid steps for v7x's 2 TCs
    grid = (pl.cdiv(B, tb),)

    apply_dropout = bool(dropout_decision) and float(dropout_rate) > 0.0

    def full_const(a):
        nd = a.ndim
        return pl.BlockSpec(a.shape, lambda i, _nd=nd: (0,) * _nd)

    x_spec = pl.BlockSpec((tb, n_inp), lambda i: (i, 0))       # tiled over rows
    in_specs = [
        x_spec,
        full_const(w1b), full_const(b1),                       # weights/biases VMEM-resident
        full_const(w2b), full_const(b2),
        full_const(w3b), full_const(b3p),
    ]
    out_spec = pl.BlockSpec((tb, n_out_p), lambda i: (i, 0))
    out_shape = jax.ShapeDtypeStruct((B, n_out_p), jnp.float32)

    flops = 2 * B * (n_inp * n_hid1 + n_hid1 * n_hid2 + n_hid2 * n_out_p)
    transcendentals = B * (n_hid1 + n_hid2)
    bytes_accessed = (4 * x.size                                    # x stays f32 in HBM
                      + 2 * (w1b.size + w2b.size + w3b.size)        # bf16 weights
                      + 4 * (b1.size + b2.size + b3p.size)
                      + 4 * B * n_out_p)

    args = [x, w1b, b1, w2b, b2, w3b, b3p]
    kernel = _mlp_kernel

    if apply_dropout:
        # Dropout masks generated outside the kernel (portable; deterministic per seed),
        # pre-scaled to {0, 1/(1-p)} so the kernel does a single VPU multiply per layer.
        keep = 1.0 - float(dropout_rate)
        key = jax.random.PRNGKey(int(seed))
        k1, k2 = jax.random.split(key)
        m1 = jax.random.bernoulli(k1, keep, (B, n_hid1)).astype(jnp.float32) * (1.0 / keep)
        m2 = jax.random.bernoulli(k2, keep, (B, n_hid2)).astype(jnp.float32) * (1.0 / keep)
        in_specs += [pl.BlockSpec((tb, n_hid1), lambda i: (i, 0)),
                     pl.BlockSpec((tb, n_hid2), lambda i: (i, 0))]
        args += [m1, m2]
        bytes_accessed += 4 * (m1.size + m2.size)
        kernel = _mlp_dropout_kernel

    out_p = pl.pallas_call(
        kernel,
        out_shape=out_shape,
        grid=grid,
        in_specs=in_specs,
        out_specs=out_spec,
        compiler_params=pltpu.CompilerParams(dimension_semantics=("parallel",)),
        cost_estimate=pl.CostEstimate(flops=flops, transcendentals=transcendentals,
                                      bytes_accessed=bytes_accessed),
        # NOTE: VMEM use is tiny (weights ~6 KB, tiles < 1 MiB even at tb=4096), so the
        # default scoped-VMEM limit is fine on v5e/v6e/v7x; no vmem_limit_bytes needed.
    )(*args)

    return out_p[:, :n_out] if n_out_p != n_out else out_p


def init_params(key, n_inp, n_hid1, n_hid2, n_out, weight_ini=1.0):
    """Xavier-uniform weights (gain=weight_ini), zero biases — matches Net.__init__.
    Weights returned as [in, out] (transposed vs. torch.nn.Linear.weight)."""
    def xavier(k, fan_in, fan_out, gain):
        bound = gain * (6.0 / (fan_in + fan_out)) ** 0.5
        w = jax.random.uniform(k, (fan_out, fan_in), jnp.float32, -bound, bound)
        return w.T

    k1, k2, k3 = jax.random.split(key, 3)
    w1 = xavier(k1, n_inp, n_hid1, weight_ini)
    b1 = jnp.zeros((1, n_hid1), jnp.float32)
    w2 = xavier(k2, n_hid1, n_hid2, weight_ini)
    b2 = jnp.zeros((1, n_hid2), jnp.float32)
    w3 = xavier(k3, n_hid2, n_out, weight_ini)
    b3 = jnp.zeros((1, n_out), jnp.float32)
    return (w1, b1, w2, b2, w3, b3)


def _ref_forward(x, params):
    w1, b1, w2, b2, w3, b3 = params
    z = jnp.tanh(x @ w1 + b1)
    z = jnp.tanh(z @ w2 + b2)
    return z @ w3 + b3


if __name__ == "__main__":
    # Small shapes consistent with the module's forward (pure MLP on [B, n_inp]).
    B, n_inp, n_hid1, n_hid2, n_out = 8, 16, 32, 32, 4
    dropout_rate = 0.5
    weight_ini = 1.0

    key = jax.random.PRNGKey(0)
    kx, kb, kp = jax.random.split(key, 3)
    x = jax.random.normal(kx, (B, n_inp), dtype=jnp.float32)
    params = init_params(kp, n_inp, n_hid1, n_hid2, n_out, weight_ini)

    # 1) Inference path (dropout off, default of Net) — single-tile grid, padded lane-dense out.
    out = jax.block_until_ready(
        net_forward(x, params, dropout_decision=False, dropout_rate=dropout_rate))
    ref = _ref_forward(x, params)
    assert out.shape == (B, n_out)
    assert jnp.allclose(out, ref, atol=5e-2, rtol=5e-2), "mismatch vs reference (single tile)"

    # 2) Multi-tile batch grid path (weights resident, batch axis parallel across grid steps).
    B_big = 512
    x_big = jax.random.normal(kb, (B_big, n_inp), dtype=jnp.float32)
    out_big = jax.block_until_ready(
        net_forward(x_big, params, dropout_decision=False, block_rows=128))
    ref_big = _ref_forward(x_big, params)
    assert out_big.shape == (B_big, n_out)
    assert jnp.allclose(out_big, ref_big, atol=5e-2, rtol=5e-2), "mismatch vs reference (tiled)"

    # 3) Dropout path: runs, deterministic for a fixed seed, correct shape.
    d1 = jax.block_until_ready(
        net_forward(x, params, dropout_decision=True, dropout_rate=dropout_rate, seed=123))
    d2 = jax.block_until_ready(
        net_forward(x, params, dropout_decision=True, dropout_rate=dropout_rate, seed=123))
    assert d1.shape == (B, n_out)
    assert jnp.allclose(d1, d2), "dropout not deterministic for fixed seed"

    print("KERNEL_OK")
</pallas_src>

<mosaic_0001>
module attributes {stable_mosaic.version = 11 : i64} {
  func.func @_mlp_kernel(%arg0: i32, %arg1: memref<8x16xf32, #tpu.memory_space<vmem>>, %arg2: memref<16x32xbf16, #tpu.memory_space<vmem>>, %arg3: memref<1x32xf32, #tpu.memory_space<vmem>>, %arg4: memref<32x32xbf16, #tpu.memory_space<vmem>>, %arg5: memref<1x32xf32, #tpu.memory_space<vmem>>, %arg6: memref<32x128xbf16, #tpu.memory_space<vmem>>, %arg7: memref<1x128xf32, #tpu.memory_space<vmem>>, %arg8: memref<8x128xf32, #tpu.memory_space<vmem>>) attributes {dimension_semantics = [#tpu.dimension_semantics<parallel>], iteration_bounds = array<i64: 1>, scalar_prefetch = 0 : i64, scratch_operands = 0 : i64, tpu.core_type = #tpu.core_type<tc>, window_params = [{transform_indices = @transform_0, window_bounds = array<i64: 8, 16>}, {pipeline_mode = #tpu.pipeline_mode<synchronous>, transform_indices = @transform_1, window_bounds = array<i64: 16, 32>}, {pipeline_mode = #tpu.pipeline_mode<synchronous>, transform_indices = @transform_2, window_bounds = array<i64: 1, 32>}, {pipeline_mode = #tpu.pipeline_mode<synchronous>, transform_indices = @transform_3, window_bounds = array<i64: 32, 32>}, {pipeline_mode = #tpu.pipeline_mode<synchronous>, transform_indices = @transform_4, window_bounds = array<i64: 1, 32>}, {pipeline_mode = #tpu.pipeline_mode<synchronous>, transform_indices = @transform_5, window_bounds = array<i64: 32, 128>}, {pipeline_mode = #tpu.pipeline_mode<synchronous>, transform_indices = @transform_6, window_bounds = array<i64: 1, 128>}, {transform_indices = @transform_7, window_bounds = array<i64: 8, 128>}]} {
    %c0 = arith.constant 0 : index
    %c0_0 = arith.constant 0 : index
    %0 = vector.load %arg1[%c0, %c0_0] : memref<8x16xf32, #tpu.memory_space<vmem>>, vector<8x16xf32>
    %1 = arith.truncf %0 : vector<8x16xf32> to vector<8x16xbf16>
    %c0_1 = arith.constant 0 : index
    %c0_2 = arith.constant 0 : index
    %2 = vector.load %arg2[%c0_1, %c0_2] : memref<16x32xbf16, #tpu.memory_space<vmem>>, vector<16x32xbf16>
    %cst = arith.constant dense<0.000000e+00> : vector<8x32xf32>
    %3 = tpu.matmul %1, %2, %cst {dimension_numbers = #tpu.dot_dimension_numbers<[1], [0], [0], [1], [0, 0, 1, 1], [], []>} : vector<8x16xbf16>, vector<16x32xbf16>, vector<8x32xf32> -> vector<8x32xf32>
    %c0_3 = arith.constant 0 : index
    %c0_4 = arith.constant 0 : index
    %4 = vector.load %arg3[%c0_3, %c0_4] : memref<1x32xf32, #tpu.memory_space<vmem>>, vector<1x32xf32>
    %5 = vector.broadcast %4 : vector<1x32xf32> to vector<8x32xf32>
    %6 = arith.addf %3, %5 : vector<8x32xf32>
    %7 = math.tanh %6 : vector<8x32xf32>
    %8 = arith.truncf %7 : vector<8x32xf32> to vector<8x32xbf16>
    %c0_5 = arith.constant 0 : index
    %c0_6 = arith.constant 0 : index
    %9 = vector.load %arg4[%c0_5, %c0_6] : memref<32x32xbf16, #tpu.memory_space<vmem>>, vector<32x32xbf16>
    %cst_7 = arith.constant dense<0.000000e+00> : vector<8x32xf32>
    %10 = tpu.matmul %8, %9, %cst_7 {dimension_numbers = #tpu.dot_dimension_numbers<[1], [0], [0], [1], [0, 0, 1, 1], [], []>} : vector<8x32xbf16>, vector<32x32xbf16>, vector<8x32xf32> -> vector<8x32xf32>
    %c0_8 = arith.constant 0 : index
    %c0_9 = arith.constant 0 : index
    %11 = vector.load %arg5[%c0_8, %c0_9] : memref<1x32xf32, #tpu.memory_space<vmem>>, vector<1x32xf32>
    %12 = vector.broadcast %11 : vector<1x32xf32> to vector<8x32xf32>
    %13 = arith.addf %10, %12 : vector<8x32xf32>
    %14 = math.tanh %13 : vector<8x32xf32>
    %15 = arith.truncf %14 : vector<8x32xf32> to vector<8x32xbf16>
    %c0_10 = arith.constant 0 : index
    %c0_11 = arith.constant 0 : index
    %16 = vector.load %arg6[%c0_10, %c0_11] : memref<32x128xbf16, #tpu.memory_space<vmem>>, vector<32x128xbf16>
    %cst_12 = arith.constant dense<0.000000e+00> : vector<8x128xf32>
    %17 = tpu.matmul %15, %16, %cst_12 {dimension_numbers = #tpu.dot_dimension_numbers<[1], [0], [0], [1], [0, 0, 1, 1], [], []>} : vector<8x32xbf16>, vector<32x128xbf16>, vector<8x128xf32> -> vector<8x128xf32>
    %c0_13 = arith.constant 0 : index
    %c0_14 = arith.constant 0 : index
    %18 = vector.load %arg7[%c0_13, %c0_14] : memref<1x128xf32, #tpu.memory_space<vmem>>, vector<1x128xf32>
    %19 = vector.broadcast %18 : vector<1x128xf32> to vector<8x128xf32>
    %20 = arith.addf %17, %19 : vector<8x128xf32>
    %c0_15 = arith.constant 0 : index
    %c0_16 = arith.constant 0 : index
    %21 = vector.load %arg8[%c0_15, %c0_16] : memref<8x128xf32, #tpu.memory_space<vmem>>, vector<8x128xf32>
    tpu.vector_store %arg8[%c0_15, %c0_16], %20 {strides = array<i32>} : memref<8x128xf32, #tpu.memory_space<vmem>>, vector<8x128xf32>,
    return
  }
  func.func @transform_0(%arg0: i32) -> (i32, i32) {
    %c0_i32 = arith.constant 0 : i32
    %c0_i32_0 = arith.constant 0 : i32
    return %arg0, %c0_i32 : i32, i32
  }
  func.func @transform_1(%arg0: i32) -> (i32, i32) {
    %c0_i32 = arith.constant 0 : i32
    %c0_i32_0 = arith.constant 0 : i32
    %c0_i32_1 = arith.constant 0 : i32
    return %c0_i32, %c0_i32_0 : i32, i32
  }
  func.func @transform_2(%arg0: i32) -> (i32, i32) {
    %c0_i32 = arith.constant 0 : i32
    %c0_i32_0 = arith.constant 0 : i32
    %c0_i32_1 = arith.constant 0 : i32
    return %c0_i32, %c0_i32_0 : i32, i32
  }
  func.func @transform_3(%arg0: i32) -> (i32, i32) {
    %c0_i32 = arith.constant 0 : i32
    %c0_i32_0 = arith.constant 0 : i32
    %c0_i32_1 = arith.constant 0 : i32
    return %c0_i32, %c0_i32_0 : i32, i32
  }
  func.func @transform_4(%arg0: i32) -> (i32, i32) {
    %c0_i32 = arith.constant 0 : i32
    %c0_i32_0 = arith.constant 0 : i32
    %c0_i32_1 = arith.constant 0 : i32
    return %c0_i32, %c0_i32_0 : i32, i32
  }
  func.func @transform_5(%arg0: i32) -> (i32, i32) {
    %c0_i32 = arith.constant 0 : i32
    %c0_i32_0 = arith.constant 0 : i32
    %c0_i32_1 = arith.constant 0 : i32
    return %c0_i32, %c0_i32_0 : i32, i32
  }
  func.func @transform_6(%arg0: i32) -> (i32, i32) {
    %c0_i32 = arith.constant 0 : i32
    %c0_i32_0 = arith.constant 0 : i32
    %c0_i32_1 = arith.constant 0 : i32
    return %c0_i32, %c0_i32_0 : i32, i32
  }
  func.func @transform_7(%arg0: i32) -> (i32, i32) {
    %c0_i32 = arith.constant 0 : i32
    %c0_i32_0 = arith.constant 0 : i32
    return %arg0, %c0_i32 : i32, i32
  }
}

</mosaic_0001>

<llo_original>
// kernel: tpu_custom_call.1
$region0: #{tpu_custom_call.1}
  #allocation0 [shape = 'u32[]', space=smem, size = 0x4, offset = 0x4, fixed_abs, tag = 'smem constant byte address 0x4 - core index']
  #allocation1 [shape = 'u32[72,128]{1,0:T(1,128)}', space=vmem, size = 0x9000, scoped, tag = 'internal scratch']
  %s0 = inlined_call_operand.hbm [shape: f32[8,16], index: 0, kind: input, shape index: {}]
  %s1 = inlined_call_operand.hbm [shape: bf16[16,32], index: 1, kind: input, shape index: {}]
  %s2 = inlined_call_operand.vmem [shape: f32[1,32], index: 2, kind: input, shape index: {}]
  %s3 = inlined_call_operand.hbm [shape: bf16[32,32], index: 3, kind: input, shape index: {}]
  %s4 = inlined_call_operand.vmem [shape: f32[1,32], index: 4, kind: input, shape index: {}]
  %s5 = inlined_call_operand.hbm [shape: bf16[32,128], index: 5, kind: input, shape index: {}]
  %s6 = inlined_call_operand.vmem [shape: f32[1,128], index: 6, kind: input, shape index: {}]
  %s7 = inlined_call_operand.hbm [shape: f32[8,128], index: 7, kind: output, shape index: {}]
  %s8 = sld [smem:[#allocation0]]
  $region54: #{tpu_custom_call.1} parent=0
    _
  %s10 = ssub.s32 1, %s8
  %s11 = scalar_select 0, %s10, %s8
  $region1: #{tpu_custom_call.1} parent=0
    #allocation2 [shape = 'u8[4096]{0}', space=vmem, size = 0x1000, scoped, tag = 'input window, operand 0, single buffered']
    #allocation3 [shape = 's32[1]{0}', space=sflag, size = 0x4, scoped, tag = 'scoped memory for tpu_custom_call.1']
    #allocation4 [shape = 's32[1]{0}', space=sflag, size = 0x4, scoped, tag = 'scoped memory for tpu_custom_call.1']
    #allocation5 [shape = 'u8[4096]{0}', space=vmem, size = 0x1000, scoped, tag = 'input window, operand 1, single buffered']
    #allocation6 [shape = 's32[1]{0}', space=sflag, size = 0x4, scoped, tag = 'scoped memory for tpu_custom_call.1']
    #allocation7 [shape = 'u8[8192]{0}', space=vmem, size = 0x2000, scoped, tag = 'input window, operand 3, single buffered']
    #allocation8 [shape = 'u8[8192]{0}', space=vmem, size = 0x2000, scoped, tag = 'input window, operand 5, single buffered']
    #allocation9 [shape = 's32[1]{0}', space=sflag, size = 0x4, scoped, tag = 'scoped memory for tpu_custom_call.1']
    #allocation10 [shape = 'u8[4096]{0}', space=vmem, size = 0x1000, scoped, tag = 'output window, operand 0, single buffered']
    %12 = vsyncpa [#allocation3], 0
    %13 = vsyncpa [#allocation6], 0
    %14 = vsyncpa [#allocation9], 0
    %15 = vsyncpa [#allocation4], 0
    // Predicated region
    $region2: #{tpu_custom_call.1} parent=1 // pred_check
      _
    $region3: #{tpu_custom_call.1} parent=1 // pred_check_branch
      %17 = sbr.rel (0) target = $region5
    $region4: #{tpu_custom_call.1} parent=1 // pred_region
      %19 = vsyncadd [#allocation3], 0
      %s21 = sshll.u32 %s0, 4
      %s22 = int_to_ptr.hbm [resolvable:$true] %s21
      %s23 = sshll.u32 [#allocation2], 4
      %s24 = int_to_ptr.vmem [resolvable:$true] %s23
      %26 = dma.hbm_to_vmem [thread:$0]  %s22, 128, %s24, [#allocation3]
    $region5: #{tpu_custom_call.1} parent=1 // pred_fallthru
      _
    // Predicated region
    $region6: #{tpu_custom_call.1} parent=1 // pred_check
      _
    $region7: #{tpu_custom_call.1} parent=1 // pred_check_branch
      %28 = sbr.rel (0) target = $region9
    $region8: #{tpu_custom_call.1} parent=1 // pred_region
      %30 = vsyncadd [#allocation6], 0
      %s31 = sshll.u32 %s1, 4
      %s32 = int_to_ptr.hbm [resolvable:$true] %s31
      %s33 = sshll.u32 [#allocation5], 4
      %s34 = int_to_ptr.vmem [resolvable:$true] %s33
      %39 = dma.hbm_to_vmem [thread:$0]  %s32, 128, %s34, [#allocation6], 64, 64, 4
    $region9: #{tpu_custom_call.1} parent=1 // pred_fallthru
      _
    // Predicated region
    $region10: #{tpu_custom_call.1} parent=1 // pred_check
      _
    $region11: #{tpu_custom_call.1} parent=1 // pred_check_branch
      %41 = sbr.rel (0) target = $region13
    $region12: #{tpu_custom_call.1} parent=1 // pred_region
      _
    $region13: #{tpu_custom_call.1} parent=1 // pred_fallthru
      _
    // Predicated region
    $region14: #{tpu_custom_call.1} parent=1 // pred_check
      _
    $region15: #{tpu_custom_call.1} parent=1 // pred_check_branch
      %43 = sbr.rel (0) target = $region17
    $region16: #{tpu_custom_call.1} parent=1 // pred_region
      %45 = vsyncadd [#allocation6], 0
      %s46 = sshll.u32 %s3, 4
      %s47 = int_to_ptr.hbm [resolvable:$true] %s46
      %s48 = sshll.u32 [#allocation7], 4
      %s49 = int_to_ptr.vmem [resolvable:$true] %s48
      %54 = dma.hbm_to_vmem [thread:$0]  %s47, 256, %s49, [#allocation6], 64, 64, 4
    $region17: #{tpu_custom_call.1} parent=1 // pred_fallthru
      _
    // Predicated region
    $region18: #{tpu_custom_call.1} parent=1 // pred_check
      _
    $region19: #{tpu_custom_call.1} parent=1 // pred_check_branch
      %56 = sbr.rel (0) target = $region21
    $region20: #{tpu_custom_call.1} parent=1 // pred_region
      _
    $region21: #{tpu_custom_call.1} parent=1 // pred_fallthru
      _
    // Predicated region
    $region22: #{tpu_custom_call.1} parent=1 // pred_check
      _
    $region23: #{tpu_custom_call.1} parent=1 // pred_check_branch
      %58 = sbr.rel (0) target = $region25
    $region24: #{tpu_custom_call.1} parent=1 // pred_region
      %60 = vsyncadd [#allocation9], 0
      %s61 = sshll.u32 %s5, 4
      %s62 = int_to_ptr.hbm [resolvable:$true] %s61
      %s63 = sshll.u32 [#allocation8], 4
      %s64 = int_to_ptr.vmem [resolvable:$true] %s63
      %69 = dma.hbm_to_vmem [thread:$0]  %s62, 256, %s64, [#allocation9], 64, 64, 4
    $region25: #{tpu_custom_call.1} parent=1 // pred_fallthru
      _
    // Predicated region
    $region26: #{tpu_custom_call.1} parent=1 // pred_check
      _
    $region27: #{tpu_custom_call.1} parent=1 // pred_check_branch
      %71 = sbr.rel (0) target = $region29
    $region28: #{tpu_custom_call.1} parent=1 // pred_region
      _
    $region29: #{tpu_custom_call.1} parent=1 // pred_fallthru
      _
    // Predicated region
    $region30: #{tpu_custom_call.1} parent=1 // pred_check
      _
    $region31: #{tpu_custom_call.1} parent=1 // pred_check_branch
      %73 = sbr.rel (0) target = $region33
    $region32: #{tpu_custom_call.1} parent=1 // pred_region
      %75 = dma.done [#allocation3], 128
    $region33: #{tpu_custom_call.1} parent=1 // pred_fallthru
      _
    // Predicated region
    $region34: #{tpu_custom_call.1} parent=1 // pred_check
      _
    $region35: #{tpu_custom_call.1} parent=1 // pred_check_branch
      %77 = sbr.rel (0) target = $region37
    $region36: #{tpu_custom_call.1} parent=1 // pred_region
      %79 = dma.done [#allocation6], 128
    $region37: #{tpu_custom_call.1} parent=1 // pred_fallthru
      _
    // Predicated region
    $region38: #{tpu_custom_call.1} parent=1 // pred_check
      _
    $region39: #{tpu_custom_call.1} parent=1 // pred_check_branch
      %81 = sbr.rel (0) target = $region41
    $region40: #{tpu_custom_call.1} parent=1 // pred_region
      %83 = dma.done [#allocation6], 256
    $region41: #{tpu_custom_call.1} parent=1 // pred_fallthru
      _
    // Predicated region
    $region42: #{tpu_custom_call.1} parent=1 // pred_check
      _
    $region43: #{tpu_custom_call.1} parent=1 // pred_check_branch
      %85 = sbr.rel (0) target = $region45
    $region44: #{tpu_custom_call.1} parent=1 // pred_region
      %87 = dma.done [#allocation9], 256
    $region45: #{tpu_custom_call.1} parent=1 // pred_fallthru
      _
    %v89 = vld [vmem:[#allocation2] sm:$0xff]
    %v90 = vpack.c.bf16 %v89, %v89
    %v91 = vld [vmem:[#allocation5] sm:$0xf]
    %v92 = vld [vmem:[#allocation5 + $0x4] sm:$0xf]
    %v93 = vld [vmem:[%s2] sm:$0x1]
    %v95 = vperm.slane %v93, 0
    %v99 = vunpack.c.l.b16 %v91
    %v100 = vunpack.c.l.b16 %v92
    %v101 = vpack.c.b16 %v100, %v99
    %vm103 = vcmask 130048
    %v105 = vsel %vm103, %v90, 0
    %107 = vmatpush.bf16.msra.mxu0 0
    %108 = vmatpush.bf16.msra.mxu0 0
    %109 = vmatpush.bf16.msra.mxu0 0
    %110 = vmatpush.bf16.msra.mxu0 0
    %111 = vmatpush.bf16.msra.mxu0 0
    %112 = vmatpush.bf16.msra.mxu0 0
    %113 = vmatpush.bf16.msra.mxu0 0
    %114 = vmatpush.bf16.msra.mxu0 %v101
    %115 = vmatmul.bf16.gmra.mxu0 %v105
    %v116 = vpop.f32.mrf.mxu0
    %v117 = vadd.f32 %v95, %v116
    %v118 = vpop.f32.mrf.mxu0
    %119 = vdwg.mxu0
    %v120 = vtanh.pop %v117
    %v121 = vpack.c.bf16 %v120, %v120
    %v122 = vld [vmem:[#allocation7] sm:$0xf]
    %v123 = vld [vmem:[#allocation7 + $0x4] sm:$0xf]
    %v124 = vld [vmem:[#allocation7 + $0x8] sm:$0xf]
    %v125 = vld [vmem:[#allocation7 + $0xc] sm:$0xf]
    %v126 = vld [vmem:[%s4] sm:$0x1]
    %v128 = vperm.slane %v126, 0
    %v134 = vunpack.c.l.b16 %v122
    %v135 = vunpack.c.l.b16 %v123
    %v136 = vunpack.c.l.b16 %v124
    %v137 = vunpack.c.l.b16 %v125
    %v138 = vpack.c.b16 %v135, %v134
    %v139 = vpack.c.b16 %v137, %v136
    %vm142 = vcmask 261120
    %v144 = vsel %vm142, %v121, 0
    %146 = vmatpush.bf16.msra.mxu0 0
    %147 = vmatpush.bf16.msra.mxu0 0
    %148 = vmatpush.bf16.msra.mxu0 0
    %149 = vmatpush.bf16.msra.mxu0 0
    %150 = vmatpush.bf16.msra.mxu0 0
    %151 = vmatpush.bf16.msra.mxu0 0
    %152 = vmatpush.bf16.msra.mxu0 %v139
    %153 = vmatpush.bf16.msra.mxu0 %v138
    %154 = vmatmul.bf16.gmra.mxu0 %v144
    %v155 = vpop.f32.mrf.mxu0
    %v156 = vadd.f32 %v128, %v155
    %v157 = vpop.f32.mrf.mxu0
    %158 = vdwg.mxu0
    %v159 = vtanh.pop %v156
    %v160 = vpack.c.bf16 %v159, %v159
    %v161 = vld [vmem:[#allocation8] sm:$0xf]
    %v162 = vld [vmem:[#allocation8 + $0x4] sm:$0xf]
    %v163 = vld [vmem:[#allocation8 + $0x8] sm:$0xf]
    %v164 = vld [vmem:[#allocation8 + $0xc] sm:$0xf]
    %v165 = vld [vmem:[%s6] sm:$0x1]
    %v167 = vperm.slane %v165, 0
    %v173 = vunpack.c.l.b16 %v161
    %v174 = vunpack.c.l.b16 %v162
    %v175 = vunpack.c.l.b16 %v163
    %v176 = vunpack.c.l.b16 %v164
    %v177 = vpack.c.b16 %v174, %v173
    %v178 = vpack.c.b16 %v176, %v175
    %v182 = vsel %vm142, %v160, 0
    %184 = vmatpush.bf16.msra.mxu0 0
    %185 = vmatpush.bf16.msra.mxu0 0
    %186 = vmatpush.bf16.msra.mxu0 0
    %187 = vmatpush.bf16.msra.mxu0 0
    %188 = vmatpush.bf16.msra.mxu0 0
    %189 = vmatpush.bf16.msra.mxu0 0
    %190 = vmatpush.bf16.msra.mxu0 %v178
    %191 = vmatpush.bf16.msra.mxu0 %v177
    %192 = vmatmul.bf16.gmra.mxu0 %v182
    %v193 = vpop.f32.mrf.mxu0
    %v194 = vadd.f32 %v167, %v193
    %v195 = vpop.f32.mrf.mxu0
    %196 = vdwg.mxu0
    %197 = vst [vmem:[#allocation10] sm:$0xff] %v194
    // Predicated region
    $region46: #{tpu_custom_call.1} parent=1 // pred_check
      _
    $region47: #{tpu_custom_call.1} parent=1 // pred_check_branch
      %199 = sbr.rel (0) target = $region49
    $region48: #{tpu_custom_call.1} parent=1 // pred_region
      %201 = vsyncadd [#allocation4], 0
      %s203 = sshll.u32 [#allocation10], 4
      %s204 = int_to_ptr.vmem [resolvable:$true] %s203
      %s205 = sshll.u32 %s7, 4
      %s206 = int_to_ptr.hbm [resolvable:$true] %s205
      %208 = dma.vmem_to_hbm [thread:$0]  %s204, 128, %s206, [#allocation4]
    $region49: #{tpu_custom_call.1} parent=1 // pred_fallthru
      _
    // Predicated region
    $region50: #{tpu_custom_call.1} parent=1 // pred_check
      _
    $region51: #{tpu_custom_call.1} parent=1 // pred_check_branch
      %210 = sbr.rel (0) target = $region53
    $region52: #{tpu_custom_call.1} parent=1 // pred_region
      %212 = dma.done [#allocation4], 128
    $region53: #{tpu_custom_call.1} parent=1 // pred_fallthru
      _
    %213 = vsyncpa [#allocation3], 1
    %214 = vsyncpa [#allocation6], 1
    %215 = vsyncpa [#allocation9], 1
    %216 = vsyncpa [#allocation4], 1

</llo_original>
